<compile_context>
chip_gen: v5e
topology: v5e:2x2
jax: 0.10.0
libtpu: 0.0.40
codegen_flags: <defaults>
</compile_context>

<pallas_src>
import jax
import jax.numpy as jnp
from jax.experimental import pallas as pl
from jax.experimental.pallas import tpu as pltpu

LANE = 128      # lane width of a vreg
SUB = 8         # sublane depth of a vreg
TILE_M = 256    # M tile for the batched/gridded path (v6e/v7x MXU fill)


def _policy_linear_kernel(y_ref, wt_ref, b_ref, o_ref):
    # y_ref: (M, H), wt_ref: (H, Opad), b_ref: (1, Opad), o_ref: (M, Opad)
    acc = jnp.dot(
        y_ref[...], wt_ref[...],
        preferred_element_type=jnp.float32,
        precision=jax.lax.Precision.HIGHEST,
    )
    o_ref[...] = (acc + b_ref[...]).astype(o_ref.dtype)


def prepare_policy_params(weight, bias):
    """One-time relayout of the static parameters (call at init, not per step).

    weight: (O, H) PyTorch nn.Linear convention
    bias:   (O,)
    Returns (wt_pad, b_pad): (H, Opad) pre-transposed weight and (1, Opad) bias,
    both zero-padded to a lane-dense width Opad = ceil(O/128)*128.
    """
    O, H = weight.shape
    Opad = pl.cdiv(O, LANE) * LANE
    wt_pad = jnp.pad(jnp.transpose(weight), ((0, 0), (0, Opad - O)))
    b_pad = jnp.pad(bias.reshape(1, O), ((0, 0), (0, Opad - O)))
    return wt_pad, b_pad


def policy_forward(y, wt_pad, b_pad, out_features):
    """Pallas equivalent of Policy.forward, using pre-prepared parameters.

    y:       (B, H)
    wt_pad:  (H, Opad) pre-transposed, lane-padded weight (from prepare_policy_params)
    b_pad:   (1, Opad) lane-padded bias
    returns  (B, out_features)
    """
    B, H = y.shape
    H2, Opad = wt_pad.shape
    assert H == H2, "hidden size mismatch"

    if B <= TILE_M:
        # Small-batch path: gridless, whole arrays resident in VMEM.
        # Pad rows to a sublane multiple of 8 -> unmasked full-tile stores.
        Mpad = pl.cdiv(B, SUB) * SUB
        y_pad = jnp.pad(y, ((0, Mpad - B), (0, 0))) if Mpad != B else y
        out_pad = pl.pallas_call(
            _policy_linear_kernel,
            out_shape=jax.ShapeDtypeStruct((Mpad, Opad), y.dtype),
            in_specs=[
                pl.BlockSpec(memory_space=pltpu.MemorySpace.VMEM),
                pl.BlockSpec(memory_space=pltpu.MemorySpace.VMEM),
                pl.BlockSpec(memory_space=pltpu.MemorySpace.VMEM),
            ],
            out_specs=pl.BlockSpec(memory_space=pltpu.MemorySpace.VMEM),
        )(y_pad, wt_pad, b_pad)
    else:
        # Batched path: grid over M, weight/bias DMA'd once and kept VMEM-resident
        # via constant index_maps; M axis parallel (shards across TCs on v7x).
        Mpad = pl.cdiv(B, TILE_M) * TILE_M
        y_pad = jnp.pad(y, ((0, Mpad - B), (0, 0))) if Mpad != B else y
        out_pad = pl.pallas_call(
            _policy_linear_kernel,
            out_shape=jax.ShapeDtypeStruct((Mpad, Opad), y.dtype),
            grid_spec=pltpu.PrefetchScalarGridSpec(
                num_scalar_prefetch=0,
                grid=(Mpad // TILE_M,),
                in_specs=[
                    pl.BlockSpec((TILE_M, H), lambda i: (i, 0)),
                    pl.BlockSpec((H, Opad), lambda i: (0, 0)),   # weight resident
                    pl.BlockSpec((1, Opad), lambda i: (0, 0)),   # bias resident
                ],
                out_specs=pl.BlockSpec((TILE_M, Opad), lambda i: (i, 0)),
            ),
            compiler_params=pltpu.CompilerParams(
                dimension_semantics=("parallel",)),
        )(y_pad, wt_pad, b_pad)

    # Slice padding back off. (If the consumer can take the padded slab, keep it
    # padded and drop this slice from the hot path.)
    return out_pad[:B, :out_features]


if __name__ == "__main__":
    # Small shapes consistent with the module:
    #   rnn_hidden_size = 32, output_size = Naction + 1 = 6, batch = 2
    B, H, O = 2, 32, 6

    key = jax.random.PRNGKey(0)
    k_y, k_w, k_b = jax.random.split(key, 3)

    y = jax.random.normal(k_y, (B, H), dtype=jnp.float32)
    # Deterministic init mimicking nn.Linear's uniform(-1/sqrt(H), 1/sqrt(H))
    bound = 1.0 / jnp.sqrt(jnp.float32(H))
    weight = jax.random.uniform(k_w, (O, H), dtype=jnp.float32,
                                minval=-bound, maxval=bound)
    bias = jax.random.uniform(k_b, (O,), dtype=jnp.float32,
                              minval=-bound, maxval=bound)

    # One-time parameter relayout at "init" time (hoisted out of the forward).
    wt_pad, b_pad = prepare_policy_params(weight, bias)
    wt_pad = jax.block_until_ready(wt_pad)
    b_pad = jax.block_until_ready(b_pad)

    # Jitted forward closes over the prepared constants: per-call work is just
    # the pallas_call (+ output slice).
    fwd = jax.jit(lambda yy: policy_forward(yy, wt_pad, b_pad, O))

    out = jax.block_until_ready(fwd(y))

    # Reference check in plain JAX (same semantics as torch nn.Linear)
    ref = y @ weight.T + bias
    assert out.shape == (B, O)
    assert jnp.allclose(out, ref, atol=1e-5, rtol=1e-5)

    print("KERNEL_OK")
</pallas_src>

<mosaic_0001>
module attributes {stable_mosaic.version = 11 : i64} {
  func.func @_policy_linear_kernel(%arg0: memref<8x32xf32, #tpu.memory_space<vmem>>, %arg1: memref<32x128xf32, #tpu.memory_space<vmem>>, %arg2: memref<1x128xf32, #tpu.memory_space<vmem>>, %arg3: memref<8x128xf32, #tpu.memory_space<vmem>>) attributes {dimension_semantics = [], scalar_prefetch = 0 : i64, scratch_operands = 0 : i64, tpu.core_type = #tpu.core_type<tc>} {
    %c0 = arith.constant 0 : index
    %c0_0 = arith.constant 0 : index
    %0 = vector.load %arg0[%c0, %c0_0] : memref<8x32xf32, #tpu.memory_space<vmem>>, vector<8x32xf32>
    %c0_1 = arith.constant 0 : index
    %c0_2 = arith.constant 0 : index
    %1 = vector.load %arg1[%c0_1, %c0_2] : memref<32x128xf32, #tpu.memory_space<vmem>>, vector<32x128xf32>
    %cst = arith.constant dense<0.000000e+00> : vector<8x128xf32>
    %2 = tpu.matmul %0, %1, %cst {dimension_numbers = #tpu.dot_dimension_numbers<[1], [0], [0], [1], [0, 0, 1, 1], [], []>, precision = #tpu.contract_precision<fp32>} : vector<8x32xf32>, vector<32x128xf32>, vector<8x128xf32> -> vector<8x128xf32>
    %c0_3 = arith.constant 0 : index
    %c0_4 = arith.constant 0 : index
    %3 = vector.load %arg2[%c0_3, %c0_4] : memref<1x128xf32, #tpu.memory_space<vmem>>, vector<1x128xf32>
    %4 = vector.broadcast %3 : vector<1x128xf32> to vector<8x128xf32>
    %5 = arith.addf %2, %4 : vector<8x128xf32>
    %c0_5 = arith.constant 0 : index
    %c0_6 = arith.constant 0 : index
    %6 = vector.load %arg3[%c0_5, %c0_6] : memref<8x128xf32, #tpu.memory_space<vmem>>, vector<8x128xf32>
    tpu.vector_store %arg3[%c0_5, %c0_6], %5 {strides = array<i32>} : memref<8x128xf32, #tpu.memory_space<vmem>>, vector<8x128xf32>,
    return
  }
}

</mosaic_0001>

<llo_original>
// kernel: _lambda_.1
$region0: #{_lambda_.1}
  #allocation0 [shape = 'u32[]', space=smem, size = 0x4, offset = 0x4, fixed_abs, tag = 'smem constant byte address 0x4 - core index']
  #allocation1 [shape = 'u32[72,128]{1,0:T(1,128)}', space=vmem, size = 0x9000, scoped, tag = 'internal scratch']
  %s0 = inlined_call_operand.vmem [shape: f32[8,32], index: 0, kind: input, shape index: {}]
  %s1 = inlined_call_operand.hbm [shape: f32[32,128], index: 1, kind: input, shape index: {}]
  %s2 = inlined_call_operand.vmem [shape: f32[1,128], index: 2, kind: input, shape index: {}]
  %s3 = inlined_call_operand.vmem [shape: f32[8,128], index: 3, kind: output, shape index: {}]
  %s4 = sld [smem:[#allocation0]]
  $region26: #{_lambda_.1} parent=0
    _
  %s6 = ssub.s32 1, %s4
  %s7 = scalar_select 0, %s6, %s4
  $region1: #{_lambda_.1} parent=0
    #allocation2 [shape = 'u8[16384]{0}', space=vmem, size = 0x4000, scoped, tag = 'input window, operand 1, single buffered']
    #allocation3 [shape = 's32[1]{0}', space=sflag, size = 0x4, scoped, tag = 'scoped memory for _lambda_.1']
    %8 = vsyncpa [#allocation3], 0
    // Predicated region
    $region2: #{_lambda_.1} parent=1 // pred_check
      _
    $region3: #{_lambda_.1} parent=1 // pred_check_branch
      %10 = sbr.rel (0) target = $region5
    $region4: #{_lambda_.1} parent=1 // pred_region
      _
    $region5: #{_lambda_.1} parent=1 // pred_fallthru
      _
    // Predicated region
    $region6: #{_lambda_.1} parent=1 // pred_check
      _
    $region7: #{_lambda_.1} parent=1 // pred_check_branch
      %12 = sbr.rel (0) target = $region9
    $region8: #{_lambda_.1} parent=1 // pred_region
      %14 = vsyncadd [#allocation3], 0
      %s15 = sshll.u32 %s1, 4
      %s16 = int_to_ptr.hbm [resolvable:$true] %s15
      %s17 = sshll.u32 [#allocation2], 4
      %s18 = int_to_ptr.vmem [resolvable:$true] %s17
      %23 = dma.hbm_to_vmem [thread:$0]  %s16, 512, %s18, [#allocation3], 128, 128, 8
    $region9: #{_lambda_.1} parent=1 // pred_fallthru
      _
    // Predicated region
    $region10: #{_lambda_.1} parent=1 // pred_check
      _
    $region11: #{_lambda_.1} parent=1 // pred_check_branch
      %25 = sbr.rel (0) target = $region13
    $region12: #{_lambda_.1} parent=1 // pred_region
      _
    $region13: #{_lambda_.1} parent=1 // pred_fallthru
      _
    // Predicated region
    $region14: #{_lambda_.1} parent=1 // pred_check
      _
    $region15: #{_lambda_.1} parent=1 // pred_check_branch
      %27 = sbr.rel (0) target = $region17
    $region16: #{_lambda_.1} parent=1 // pred_region
      %29 = dma.done [#allocation3], 512
    $region17: #{_lambda_.1} parent=1 // pred_fallthru
      _
    %v30 = vld [vmem:[%s0] sm:$0xff]
    %v31 = vld [vmem:[#allocation2] sm:$0xff]
    %v32 = vld [vmem:[#allocation2 + $0x8] sm:$0xff]
    %v33 = vld [vmem:[#allocation2 + $0x10] sm:$0xff]
    %v34 = vld [vmem:[#allocation2 + $0x18] sm:$0xff]
    %v35 = vld [vmem:[%s2] sm:$0x1]
    %v37 = vperm.slane %v35, 0
    %vm39 = vcmask 261120
    %v41 = vsel %vm39, %v30, 0
    %43 = vmatpush.msra.mxu0 0.0
    %44 = vmatpush.msra.mxu0 0.0
    %45 = vmatpush.msra.mxu0 0.0
    %46 = vmatpush.msra.mxu0 0.0
    %47 = vmatpush.msra.mxu0 0.0
    %48 = vmatpush.msra.mxu0 0.0
    %49 = vmatpush.msra.mxu0 0.0
    %50 = vmatpush.msra.mxu0 0.0
    %51 = vmatpush.msra.mxu0 0.0
    %52 = vmatpush.msra.mxu0 0.0
    %53 = vmatpush.msra.mxu0 0.0
    %54 = vmatpush.msra.mxu0 0.0
    %v55 = vand.u32 %v34, 4294901760
    %56 = vmatpush.msra.mxu0 %v55
    %v57 = vand.u32 %v33, 4294901760
    %58 = vmatpush.msra.mxu0 %v57
    %v59 = vand.u32 %v32, 4294901760
    %60 = vmatpush.msra.mxu0 %v59
    %v61 = vand.u32 %v31, 4294901760
    %62 = vmatpush.msra.mxu0 %v61
    %v63 = vand.u32 %v41, 4294901760
    %v64 = vsub.f32 %v41, %v63
    %v65 = vand.u32 %v64, 4294901760
    %v66 = vsub.f32 %v64, %v65
    %v67 = vand.u32 %v66, 4294901760
    %68 = vmatmul.f32.gmra.mxu0 %v67
    %v69 = vpop.f32.mrf.mxu0
    %v70 = vadd.f32 %v37, %v69
    %71 = vdwg.mxu0
    %72 = vmatpush.msra.mxu0 0.0
    %73 = vmatpush.msra.mxu0 0.0
    %74 = vmatpush.msra.mxu0 0.0
    %75 = vmatpush.msra.mxu0 0.0
    %76 = vmatpush.msra.mxu0 0.0
    %77 = vmatpush.msra.mxu0 0.0
    %78 = vmatpush.msra.mxu0 0.0
    %79 = vmatpush.msra.mxu0 0.0
    %80 = vmatpush.msra.mxu0 0.0
    %81 = vmatpush.msra.mxu0 0.0
    %82 = vmatpush.msra.mxu0 0.0
    %83 = vmatpush.msra.mxu0 0.0
    %v84 = vand.u32 %v34, 4294901760
    %v85 = vsub.f32 %v34, %v84
    %v86 = vand.u32 %v85, 4294901760
    %v87 = vsub.f32 %v85, %v86
    %v88 = vand.u32 %v87, 4294901760
    %89 = vmatpush.msra.mxu0 %v88
    %v90 = vand.u32 %v33, 4294901760
    %v91 = vsub.f32 %v33, %v90
    %v92 = vand.u32 %v91, 4294901760
    %v93 = vsub.f32 %v91, %v92
    %v94 = vand.u32 %v93, 4294901760
    %95 = vmatpush.msra.mxu0 %v94
    %v96 = vand.u32 %v32, 4294901760
    %v97 = vsub.f32 %v32, %v96
    %v98 = vand.u32 %v97, 4294901760
    %v99 = vsub.f32 %v97, %v98
    %v100 = vand.u32 %v99, 4294901760
    %101 = vmatpush.msra.mxu0 %v100
    %v102 = vand.u32 %v31, 4294901760
    %v103 = vsub.f32 %v31, %v102
    %v104 = vand.u32 %v103, 4294901760
    %v105 = vsub.f32 %v103, %v104
    %v106 = vand.u32 %v105, 4294901760
    %107 = vmatpush.msra.mxu0 %v106
    %v108 = vand.u32 %v41, 4294901760
    %109 = vmatmul.f32.gmra.mxu0 %v108
    %v110 = vpop.f32.mrf.mxu0
    %v111 = vadd.f32 %v70, %v110
    %112 = vdwg.mxu0
    %113 = vmatpush.msra.mxu0 0.0
    %114 = vmatpush.msra.mxu0 0.0
    %115 = vmatpush.msra.mxu0 0.0
    %116 = vmatpush.msra.mxu0 0.0
    %117 = vmatpush.msra.mxu0 0.0
    %118 = vmatpush.msra.mxu0 0.0
    %119 = vmatpush.msra.mxu0 0.0
    %120 = vmatpush.msra.mxu0 0.0
    %121 = vmatpush.msra.mxu0 0.0
    %122 = vmatpush.msra.mxu0 0.0
    %123 = vmatpush.msra.mxu0 0.0
    %124 = vmatpush.msra.mxu0 0.0
    %v125 = vand.u32 %v34, 4294901760
    %v126 = vsub.f32 %v34, %v125
    %127 = vmatpush.msra.mxu0 %v126
    %v128 = vand.u32 %v33, 4294901760
    %v129 = vsub.f32 %v33, %v128
    %130 = vmatpush.msra.mxu0 %v129
    %v131 = vand.u32 %v32, 4294901760
    %v132 = vsub.f32 %v32, %v131
    %133 = vmatpush.msra.mxu0 %v132
    %v134 = vand.u32 %v31, 4294901760
    %v135 = vsub.f32 %v31, %v134
    %136 = vmatpush.msra.mxu0 %v135
    %v137 = vand.u32 %v41, 4294901760
    %v138 = vsub.f32 %v41, %v137
    %139 = vmatmul.f32.gmra.mxu0 %v138
    %v140 = vpop.f32.mrf.mxu0
    %v141 = vadd.f32 %v111, %v140
    %142 = vdwg.mxu0
    %143 = vmatpush.msra.mxu0 0.0
    %144 = vmatpush.msra.mxu0 0.0
    %145 = vmatpush.msra.mxu0 0.0
    %146 = vmatpush.msra.mxu0 0.0
    %147 = vmatpush.msra.mxu0 0.0
    %148 = vmatpush.msra.mxu0 0.0
    %149 = vmatpush.msra.mxu0 0.0
    %150 = vmatpush.msra.mxu0 0.0
    %151 = vmatpush.msra.mxu0 0.0
    %152 = vmatpush.msra.mxu0 0.0
    %153 = vmatpush.msra.mxu0 0.0
    %154 = vmatpush.msra.mxu0 0.0
    %v155 = vand.u32 %v34, 4294901760
    %156 = vmatpush.msra.mxu0 %v155
    %v157 = vand.u32 %v33, 4294901760
    %158 = vmatpush.msra.mxu0 %v157
    %v159 = vand.u32 %v32, 4294901760
    %160 = vmatpush.msra.mxu0 %v159
    %v161 = vand.u32 %v31, 4294901760
    %162 = vmatpush.msra.mxu0 %v161
    %v163 = vand.u32 %v41, 4294901760
    %v164 = vsub.f32 %v41, %v163
    %v165 = vand.u32 %v164, 4294901760
    %166 = vmatmul.f32.gmra.mxu0 %v165
    %v167 = vpop.f32.mrf.mxu0
    %v168 = vadd.f32 %v141, %v167
    %169 = vdwg.mxu0
    %170 = vmatpush.msra.mxu0 0.0
    %171 = vmatpush.msra.mxu0 0.0
    %172 = vmatpush.msra.mxu0 0.0
    %173 = vmatpush.msra.mxu0 0.0
    %174 = vmatpush.msra.mxu0 0.0
    %175 = vmatpush.msra.mxu0 0.0
    %176 = vmatpush.msra.mxu0 0.0
    %177 = vmatpush.msra.mxu0 0.0
    %178 = vmatpush.msra.mxu0 0.0
    %179 = vmatpush.msra.mxu0 0.0
    %180 = vmatpush.msra.mxu0 0.0
    %181 = vmatpush.msra.mxu0 0.0
    %v182 = vand.u32 %v34, 4294901760
    %v183 = vsub.f32 %v34, %v182
    %v184 = vand.u32 %v183, 4294901760
    %185 = vmatpush.msra.mxu0 %v184
    %v186 = vand.u32 %v33, 4294901760
    %v187 = vsub.f32 %v33, %v186
    %v188 = vand.u32 %v187, 4294901760
    %189 = vmatpush.msra.mxu0 %v188
    %v190 = vand.u32 %v32, 4294901760
    %v191 = vsub.f32 %v32, %v190
    %v192 = vand.u32 %v191, 4294901760
    %193 = vmatpush.msra.mxu0 %v192
    %v194 = vand.u32 %v31, 4294901760
    %v195 = vsub.f32 %v31, %v194
    %v196 = vand.u32 %v195, 4294901760
    %197 = vmatpush.msra.mxu0 %v196
    %v198 = vand.u32 %v41, 4294901760
    %199 = vmatmul.f32.gmra.mxu0 %v198
    %v200 = vpop.f32.mrf.mxu0
    %v201 = vadd.f32 %v168, %v200
    %202 = vdwg.mxu0
    %203 = vmatpush.msra.mxu0 0.0
    %204 = vmatpush.msra.mxu0 0.0
    %205 = vmatpush.msra.mxu0 0.0
    %206 = vmatpush.msra.mxu0 0.0
    %207 = vmatpush.msra.mxu0 0.0
    %208 = vmatpush.msra.mxu0 0.0
    %209 = vmatpush.msra.mxu0 0.0
    %210 = vmatpush.msra.mxu0 0.0
    %211 = vmatpush.msra.mxu0 0.0
    %212 = vmatpush.msra.mxu0 0.0
    %213 = vmatpush.msra.mxu0 0.0
    %214 = vmatpush.msra.mxu0 0.0
    %v215 = vand.u32 %v34, 4294901760
    %216 = vmatpush.msra.mxu0 %v215
    %v217 = vand.u32 %v33, 4294901760
    %218 = vmatpush.msra.mxu0 %v217
    %v219 = vand.u32 %v32, 4294901760
    %220 = vmatpush.msra.mxu0 %v219
    %v221 = vand.u32 %v31, 4294901760
    %222 = vmatpush.msra.mxu0 %v221
    %v223 = vand.u32 %v41, 4294901760
    %224 = vmatmul.f32.gmra.mxu0 %v223
    %v225 = vpop.f32.mrf.mxu0
    %v226 = vadd.f32 %v201, %v225
    %227 = vdwg.mxu0
    %228 = vst [vmem:[%s3] sm:$0xff] %v226
    // Predicated region
    $region18: #{_lambda_.1} parent=1 // pred_check
      _
    $region19: #{_lambda_.1} parent=1 // pred_check_branch
      %230 = sbr.rel (0) target = $region21
    $region20: #{_lambda_.1} parent=1 // pred_region
      _
    $region21: #{_lambda_.1} parent=1 // pred_fallthru
      _
    // Predicated region
    $region22: #{_lambda_.1} parent=1 // pred_check
      _
    $region23: #{_lambda_.1} parent=1 // pred_check_branch
      %232 = sbr.rel (0) target = $region25
    $region24: #{_lambda_.1} parent=1 // pred_region
      _
    $region25: #{_lambda_.1} parent=1 // pred_fallthru
      _
    %233 = vsyncpa [#allocation3], 1

</llo_original>
